<compile_context>
chip_gen: v7x
topology: tpu7x:2x2x1
jax: 0.10.0
libtpu: 0.0.40
codegen_flags: <defaults>
</compile_context>

<pallas_src>
import functools

import jax
import jax.numpy as jnp
from jax.experimental import pallas as pl
from jax.experimental.pallas import tpu as pltpu

FOCAL_ALPHA = 0.25
FOCAL_GAMMA = 2.0


def _round_up(x, m):
    return ((x + m - 1) // m) * m


def _focal_weight(u, gamma):
    """(1 - pt) ** gamma.  Multiply chain (VALU-only) for small integer gamma,
    general jnp.power (log+exp on the single EUP slot) otherwise."""
    g = float(gamma)
    if g == int(g) and 0 <= int(g) <= 8:
        k = int(g)
        if k == 0:
            return jnp.ones_like(u)
        w = u
        for _ in range(k - 1):
            w = w * u
        return w
    return jnp.power(u, g)


# ----------------------------------------------------------------------------
# Fast path: C divides 128.  Logits are viewed as (n_rows, 128) via a FREE
# row-major reshape; each 128-lane row holds spr = 128 // C complete samples.
# ----------------------------------------------------------------------------

def _packed_focal_kernel(logits_ref, tgt_ref, out_ref, *, alpha, gamma, c,
                         n_valid, spr):
    # logits_ref: (tile_rows, 128) native dtype  (spr samples per row)
    # tgt_ref   : (tile_rows, 128) int8 -- per-lane target class of that lane's sample
    # out_ref   : (1, 1, 128) f32 -- this tile's sublane-summed partial focal sums
    pid = pl.program_id(0)

    x = logits_ref[...].astype(jnp.float32)        # in-kernel upcast (native DMA)
    x = jnp.clip(x, -100.0, 100.0)                 # torch.clamp(inputs, -100, 100)
    rows, lanes = x.shape
    log2c = max(c.bit_length() - 1, 0)

    lane = jax.lax.broadcasted_iota(jnp.int32, (1, lanes), 1)     # (1, 128)
    row = jax.lax.broadcasted_iota(jnp.int32, (rows, 1), 0)       # (rows, 1)
    cls = lane & (c - 1)                                          # class id of a lane

    onehot = (cls == tgt_ref[...].astype(jnp.int32)).astype(jnp.float32)

    # Per-sample max, broadcast to every lane of its group: butterfly all-reduce
    # over the C consecutive lanes of each sample (XLU rolls + VALU selects).
    m = x
    s = 1
    while s < c:
        up = pltpu.roll(m, shift=lanes - s, axis=1)   # lane l -> value at lane l+s
        dn = pltpu.roll(m, shift=s, axis=1)           # lane l -> value at lane l-s
        m = jnp.maximum(m, jnp.where((lane & s) == 0, up, dn))
        s *= 2

    e = jnp.exp(x - m)                                # EUP pass 1 (reused below)

    # Group sums; only the group-leader lane (cls == 0) of each sample needs to
    # be correct, so a plain shift-reduce (roll + add) suffices.
    ex = e                  # -> sum_j exp(x_j - m)   (softmax denominator)
    et = e * onehot         # -> exp(x_t - m)         (target numerator)
    xt = x * onehot         # -> x_t                  (target logit)
    s = 1
    while s < c:
        sh = lanes - s
        ex = ex + pltpu.roll(ex, shift=sh, axis=1)
        et = et + pltpu.roll(et, shift=sh, axis=1)
        xt = xt + pltpu.roll(xt, shift=sh, axis=1)
        s *= 2

    # cross_entropy = logsumexp(x) - x_t ; pt = clamp(softmax prob of target).
    ce = (m - xt) + jnp.log(ex)                       # EUP pass 2
    pt = jnp.clip(et / ex, 1e-8, 1.0 - 1e-8)
    focal = alpha * _focal_weight(1.0 - pt, gamma) * ce

    # Keep one lane per sample (its group leader), drop padded / out-of-range
    # samples, and zero non-finite values (torch.where(isfinite, ., 0)).
    sample = (pid * rows + row) * spr + (lane >> log2c)
    keep = (cls == 0) & (sample < n_valid) & jnp.isfinite(focal)
    focal = jnp.where(keep, focal, 0.0)

    out_ref[...] = jnp.sum(focal, axis=0, keepdims=True).reshape(1, 1, lanes)


def _pick_tile_rows(n_rows, itemsize):
    # ~10 MiB budget: double-buffered logits + int8 target blocks plus ~12 live
    # f32 (tile_rows, 128) temporaries -> stays under v5e's 16 MiB scoped
    # default and well under v7x's 64 MiB physical VMEM.
    budget = 10 * 1024 * 1024
    per_row = 128 * (2 * itemsize + 2 * 1 + 12 * 4)
    tile = budget // per_row
    tile = max(32, min(2048, (tile // 32) * 32))
    # Prefer >= 2 grid steps so ("parallel",) can shard across both v7x cores.
    tile = min(tile, max(32, _round_up(pl.cdiv(n_rows, 2), 32)))
    return tile


def _focal_sum_packed(logits, targets, alpha, gamma, tile_rows=None):
    n, c = logits.shape
    spr = 128 // c                                   # samples per packed row
    n_pad = _round_up(n, spr)

    flat = logits.reshape(n * c)                     # free row-major view
    tgt = targets.astype(jnp.int8)                   # class index fits int8 (C<=128)
    if n_pad != n:
        # One extra HBM pass, only when N is not a multiple of 128 // C.
        flat = jnp.pad(flat, (0, (n_pad - n) * c))
        tgt = jnp.pad(tgt, (0, n_pad - n))
    n_rows = (n_pad * c) // 128
    packed = flat.reshape(n_rows, 128)               # still free (same linear order)
    # Per-lane target class (int8): ~N*C bytes -- far cheaper than transposing
    # the logits in HBM and the only extra traffic this path needs.
    t_lane = jnp.repeat(tgt, c).reshape(n_rows, 128)

    itemsize = jnp.dtype(logits.dtype).itemsize
    if tile_rows is None:
        tile_rows = _pick_tile_rows(n_rows, itemsize)
    num_tiles = pl.cdiv(n_rows, tile_rows)

    cost = pl.CostEstimate(
        flops=40 * n_rows * 128,
        transcendentals=2 * n_rows * 128,
        bytes_accessed=n_rows * 128 * (itemsize + 1) + num_tiles * 128 * 4,
    )

    partials = pl.pallas_call(
        functools.partial(_packed_focal_kernel, alpha=float(alpha),
                          gamma=float(gamma), c=c, n_valid=n, spr=spr),
        out_shape=jax.ShapeDtypeStruct((num_tiles, 1, 128), jnp.float32),
        grid=(num_tiles,),
        in_specs=[
            pl.BlockSpec((tile_rows, 128), lambda i: (i, 0)),
            pl.BlockSpec((tile_rows, 128), lambda i: (i, 0)),
        ],
        out_specs=pl.BlockSpec((1, 1, 128), lambda i: (i, 0, 0)),
        compiler_params=pltpu.CompilerParams(
            dimension_semantics=("parallel",),
            vmem_limit_bytes=32 * 1024 * 1024),
        cost_estimate=cost,
    )(packed, t_lane)

    # Small (num_tiles, 1, 128) slab: plain f32 reduce in the wrapper.
    # TODO(synk): for N >= ~1e7 consider pairwise/f64 accumulation here.
    return jnp.sum(partials)


# ----------------------------------------------------------------------------
# General-C fallback (128 % C != 0): lane-dense (C, N) layout.  The wrapper
# transpose costs one extra HBM pass; unavoidable without a free packed layout.
# ----------------------------------------------------------------------------

def _transposed_focal_kernel(logits_ref, targets_ref, out_ref, *, alpha, gamma,
                             n_total):
    # logits_ref : (C, TILE_N) native dtype -- classes on sublanes, samples on lanes
    # targets_ref: (1, TILE_N) int32
    # out_ref    : (1, 1, 128) f32 -- this tile's partial focal sum (lane-broadcast)
    pid = pl.program_id(0)

    x = jnp.clip(logits_ref[...].astype(jnp.float32), -100.0, 100.0)
    c, t = x.shape

    m = jnp.max(x, axis=0, keepdims=True)                              # (1, T)
    e = jnp.exp(x - m)                                                 # EUP pass 1
    s = jnp.sum(e, axis=0, keepdims=True)                              # (1, T)

    cls_idx = jax.lax.broadcasted_iota(jnp.int32, (c, t), 0)
    onehot = (cls_idx == targets_ref[...]).astype(jnp.float32)
    x_t = jnp.sum(x * onehot, axis=0, keepdims=True)
    e_t = jnp.sum(e * onehot, axis=0, keepdims=True)

    ce = (m - x_t) + jnp.log(s)                                        # EUP pass 2
    pt = jnp.clip(e_t / s, 1e-8, 1.0 - 1e-8)
    focal = alpha * _focal_weight(1.0 - pt, gamma) * ce

    col = pid * t + jax.lax.broadcasted_iota(jnp.int32, (1, t), 1)
    keep = (col < n_total) & jnp.isfinite(focal)
    focal = jnp.where(keep, focal, 0.0)

    out_ref[...] = jnp.full((1, 1, 128), jnp.sum(focal), dtype=out_ref.dtype)


def _pick_tile_n(n, c, itemsize):
    c_pad = max(8, _round_up(c, 8))
    budget = 10 * 1024 * 1024
    per_col = c_pad * (2 * itemsize + 8 * 4) + 2 * 4
    tile = budget // per_col
    tile = max(128, min(32768, (tile // 128) * 128))
    tile = min(tile, max(128, _round_up(pl.cdiv(n, 2), 128)))
    return tile


def _focal_sum_transposed(logits, targets, alpha, gamma, tile_n=None):
    n, c = logits.shape
    itemsize = jnp.dtype(logits.dtype).itemsize
    if tile_n is None:
        tile_n = _pick_tile_n(n, c, itemsize)
    num_tiles = pl.cdiv(n, tile_n)

    logits_t = logits.T                                   # (C, N), native dtype
    targets_2d = targets.astype(jnp.int32).reshape(1, n)  # (1, N)

    cost = pl.CostEstimate(
        flops=20 * n * c,
        transcendentals=2 * n * c,
        bytes_accessed=3 * n * c * itemsize + n * 4 + num_tiles * 128 * 4,
    )

    partials = pl.pallas_call(
        functools.partial(_transposed_focal_kernel, alpha=float(alpha),
                          gamma=float(gamma), n_total=n),
        out_shape=jax.ShapeDtypeStruct((num_tiles, 1, 128), jnp.float32),
        grid=(num_tiles,),
        in_specs=[
            pl.BlockSpec((c, tile_n), lambda i: (0, i)),
            pl.BlockSpec((1, tile_n), lambda i: (0, i)),
        ],
        out_specs=pl.BlockSpec((1, 1, 128), lambda i: (i, 0, 0)),
        compiler_params=pltpu.CompilerParams(
            dimension_semantics=("parallel",),
            vmem_limit_bytes=32 * 1024 * 1024),
        cost_estimate=cost,
    )(logits_t, targets_2d)

    return jnp.sum(partials[:, 0, 0])


# ----------------------------------------------------------------------------
# Public entry point.
# ----------------------------------------------------------------------------

def focal_loss(logits, targets, *, alpha=FOCAL_ALPHA, gamma=FOCAL_GAMMA,
               reduction='mean', tile=None):
    """logits: (N, C) float (any float dtype), targets: (N,) int class indices."""
    n, c = logits.shape
    if 128 % c == 0:
        total = _focal_sum_packed(logits, targets, alpha, gamma, tile_rows=tile)
    else:
        total = _focal_sum_transposed(logits, targets, alpha, gamma, tile_n=tile)
    if reduction == 'mean':
        return total / jnp.float32(n)        # divide by the GLOBAL N
    if reduction == 'sum':
        return total
    # TODO(synk): reduction='none' (per-element focal output) is not emitted by
    # this sum-reducing kernel; only 'mean' / 'sum' are supported here.
    raise NotImplementedError("reduction='none' not supported by this kernel")


def _focal_loss_ref(logits, targets, alpha=FOCAL_ALPHA, gamma=FOCAL_GAMMA):
    # Pure-JAX reference mirroring the PyTorch forward pass.
    # TODO(synk): the torch module's host-side NaN/Inf warning print is a debug
    # side effect only and is not reproduced.
    x = jnp.clip(logits.astype(jnp.float32), -100.0, 100.0)
    lse = jax.nn.logsumexp(x, axis=-1)
    x_t = jnp.take_along_axis(x, targets[:, None].astype(jnp.int32), axis=-1)[:, 0]
    ce = lse - x_t
    pt = jnp.clip(jnp.exp(-ce), 1e-8, 1.0 - 1e-8)
    fl = alpha * (1.0 - pt) ** gamma * ce
    fl = jnp.where(jnp.isfinite(fl), fl, 0.0)
    return fl.mean()


if __name__ == "__main__":
    key = jax.random.PRNGKey(0)
    k1, k2, k3, k4, k5, k6 = jax.random.split(key, 6)

    # 1) Detection-head-like shape: packed fast path, single tile, exact rows.
    N, C = 64, 8
    logits = jax.random.normal(k1, (N, C), dtype=jnp.float32) * 3.0
    targets = jax.random.randint(k2, (N,), 0, C, dtype=jnp.int32)
    out = jax.block_until_ready(focal_loss(logits, targets))
    ref = _focal_loss_ref(logits, targets)
    assert jnp.allclose(out, ref, atol=1e-5, rtol=1e-5), (out, ref)
    out_sum = jax.block_until_ready(focal_loss(logits, targets, reduction='sum'))
    assert jnp.allclose(out_sum, ref * N, atol=1e-4, rtol=1e-5), (out_sum, ref * N)

    # 2) Packed path: multi-tile grid, ragged last tile and padded samples
    #    (N not a multiple of 128 // C), forced small tile + bf16 native DMA.
    N2 = 600
    logits2 = (jax.random.normal(k3, (N2, C), dtype=jnp.float32) * 3.0
               ).astype(jnp.bfloat16)
    targets2 = jax.random.randint(k4, (N2,), 0, C, dtype=jnp.int32)
    out2 = jax.block_until_ready(focal_loss(logits2, targets2, tile=32))
    ref2 = _focal_loss_ref(logits2, targets2)
    assert jnp.allclose(out2, ref2, atol=1e-5, rtol=1e-4), (out2, ref2)

    # 3) General-C fallback (C does not divide 128).
    N3, C3 = 100, 21
    logits3 = jax.random.normal(k5, (N3, C3), dtype=jnp.float32) * 3.0
    targets3 = jax.random.randint(k6, (N3,), 0, C3, dtype=jnp.int32)
    out3 = jax.block_until_ready(focal_loss(logits3, targets3))
    ref3 = _focal_loss_ref(logits3, targets3)
    assert jnp.allclose(out3, ref3, atol=1e-5, rtol=1e-5), (out3, ref3)

    print("KERNEL_OK")
</pallas_src>

<mosaic_0001>
module attributes {stable_mosaic.version = 11 : i64} {
  func.func @_packed_focal_kernel(%arg0: i32, %arg1: memref<32x128xf32, #tpu.memory_space<vmem>>, %arg2: memref<32x128xi8, #tpu.memory_space<vmem>>, %arg3: memref<1x1x128xf32, #tpu.memory_space<vmem>>) attributes {dimension_semantics = [#tpu.dimension_semantics<parallel>], iteration_bounds = array<i64: 1>, scalar_prefetch = 0 : i64, scratch_operands = 0 : i64, tpu.core_type = #tpu.core_type<tc>, window_params = [{transform_indices = @transform_0, window_bounds = array<i64: 32, 128>}, {transform_indices = @transform_1, window_bounds = array<i64: 32, 128>}, {transform_indices = @transform_2, window_bounds = array<i64: 1, 1, 128>}]} {
    %c0 = arith.constant 0 : index
    %c0_0 = arith.constant 0 : index
    %0 = vector.load %arg1[%c0, %c0_0] : memref<32x128xf32, #tpu.memory_space<vmem>>, vector<32x128xf32>
    %cst = arith.constant -1.000000e+02 : f32
    %cst_1 = arith.constant 1.000000e+02 : f32
    %1 = vector.broadcast %cst : f32 to vector<32x128xf32>
    %2 = arith.maximumf %1, %0 : vector<32x128xf32>
    %3 = vector.broadcast %cst_1 : f32 to vector<32x128xf32>
    %4 = arith.minimumf %3, %2 : vector<32x128xf32>
    %5 = tpu.iota {dimensions = array<i32: 1>} : vector<1x128xi32>
    %6 = tpu.iota {dimensions = array<i32: 0>} : vector<32x1xi32>
    %c7_i32 = arith.constant 7 : i32
    %7 = vector.broadcast %c7_i32 : i32 to vector<1x128xi32>
    %8 = arith.andi %5, %7 : vector<1x128xi32>
    %c0_2 = arith.constant 0 : index
    %c0_3 = arith.constant 0 : index
    %9 = vector.load %arg2[%c0_2, %c0_3] : memref<32x128xi8, #tpu.memory_space<vmem>>, vector<32x128xi8>
    %10 = arith.extsi %9 : vector<32x128xi8> to vector<32x128xi32>
    %11 = vector.broadcast %8 : vector<1x128xi32> to vector<32x128xi32>
    %12 = arith.cmpi eq, %11, %10 : vector<32x128xi32>
    %13 = arith.extui %12 : vector<32x128xi1> to vector<32x128xi32>
    %14 = arith.sitofp %13 : vector<32x128xi32> to vector<32x128xf32>
    %c127_i32 = arith.constant 127 : i32
    %15 = tpu.dynamic_rotate %4 by %c127_i32 dim 1 : vector<32x128xf32>, i32 -> vector<32x128xf32>
    %c1_i32 = arith.constant 1 : i32
    %16 = tpu.dynamic_rotate %4 by %c1_i32 dim 1 : vector<32x128xf32>, i32 -> vector<32x128xf32>
    %c1_i32_4 = arith.constant 1 : i32
    %17 = vector.broadcast %c1_i32_4 : i32 to vector<1x128xi32>
    %18 = arith.andi %5, %17 : vector<1x128xi32>
    %c0_i32 = arith.constant 0 : i32
    %19 = vector.broadcast %c0_i32 : i32 to vector<1x128xi32>
    %20 = arith.cmpi eq, %18, %19 : vector<1x128xi32>
    %21 = vector.shape_cast %20 : vector<1x128xi1> to vector<1x128xi1>
    %22 = vector.broadcast %21 : vector<1x128xi1> to vector<32x128xi1>
    %23 = arith.select %22, %15, %16 : vector<32x128xi1>, vector<32x128xf32>
    %24 = arith.maximumf %4, %23 : vector<32x128xf32>
    %c126_i32 = arith.constant 126 : i32
    %25 = tpu.dynamic_rotate %24 by %c126_i32 dim 1 : vector<32x128xf32>, i32 -> vector<32x128xf32>
    %c2_i32 = arith.constant 2 : i32
    %26 = tpu.dynamic_rotate %24 by %c2_i32 dim 1 : vector<32x128xf32>, i32 -> vector<32x128xf32>
    %c2_i32_5 = arith.constant 2 : i32
    %27 = vector.broadcast %c2_i32_5 : i32 to vector<1x128xi32>
    %28 = arith.andi %5, %27 : vector<1x128xi32>
    %c0_i32_6 = arith.constant 0 : i32
    %29 = vector.broadcast %c0_i32_6 : i32 to vector<1x128xi32>
    %30 = arith.cmpi eq, %28, %29 : vector<1x128xi32>
    %31 = vector.shape_cast %30 : vector<1x128xi1> to vector<1x128xi1>
    %32 = vector.broadcast %31 : vector<1x128xi1> to vector<32x128xi1>
    %33 = arith.select %32, %25, %26 : vector<32x128xi1>, vector<32x128xf32>
    %34 = arith.maximumf %24, %33 : vector<32x128xf32>
    %c124_i32 = arith.constant 124 : i32
    %35 = tpu.dynamic_rotate %34 by %c124_i32 dim 1 : vector<32x128xf32>, i32 -> vector<32x128xf32>
    %c4_i32 = arith.constant 4 : i32
    %36 = tpu.dynamic_rotate %34 by %c4_i32 dim 1 : vector<32x128xf32>, i32 -> vector<32x128xf32>
    %c4_i32_7 = arith.constant 4 : i32
    %37 = vector.broadcast %c4_i32_7 : i32 to vector<1x128xi32>
    %38 = arith.andi %5, %37 : vector<1x128xi32>
    %c0_i32_8 = arith.constant 0 : i32
    %39 = vector.broadcast %c0_i32_8 : i32 to vector<1x128xi32>
    %40 = arith.cmpi eq, %38, %39 : vector<1x128xi32>
    %41 = vector.shape_cast %40 : vector<1x128xi1> to vector<1x128xi1>
    %42 = vector.broadcast %41 : vector<1x128xi1> to vector<32x128xi1>
    %43 = arith.select %42, %35, %36 : vector<32x128xi1>, vector<32x128xf32>
    %44 = arith.maximumf %34, %43 : vector<32x128xf32>
    %45 = arith.subf %4, %44 : vector<32x128xf32>
    %46 = math.exp %45 : vector<32x128xf32>
    %47 = arith.mulf %46, %14 : vector<32x128xf32>
    %48 = arith.mulf %4, %14 : vector<32x128xf32>
    %c127_i32_9 = arith.constant 127 : i32
    %49 = tpu.dynamic_rotate %46 by %c127_i32_9 dim 1 : vector<32x128xf32>, i32 -> vector<32x128xf32>
    %50 = arith.addf %46, %49 : vector<32x128xf32>
    %c127_i32_10 = arith.constant 127 : i32
    %51 = tpu.dynamic_rotate %47 by %c127_i32_10 dim 1 : vector<32x128xf32>, i32 -> vector<32x128xf32>
    %52 = arith.addf %47, %51 : vector<32x128xf32>
    %c127_i32_11 = arith.constant 127 : i32
    %53 = tpu.dynamic_rotate %48 by %c127_i32_11 dim 1 : vector<32x128xf32>, i32 -> vector<32x128xf32>
    %54 = arith.addf %48, %53 : vector<32x128xf32>
    %c126_i32_12 = arith.constant 126 : i32
    %55 = tpu.dynamic_rotate %50 by %c126_i32_12 dim 1 : vector<32x128xf32>, i32 -> vector<32x128xf32>
    %56 = arith.addf %50, %55 : vector<32x128xf32>
    %c126_i32_13 = arith.constant 126 : i32
    %57 = tpu.dynamic_rotate %52 by %c126_i32_13 dim 1 : vector<32x128xf32>, i32 -> vector<32x128xf32>
    %58 = arith.addf %52, %57 : vector<32x128xf32>
    %c126_i32_14 = arith.constant 126 : i32
    %59 = tpu.dynamic_rotate %54 by %c126_i32_14 dim 1 : vector<32x128xf32>, i32 -> vector<32x128xf32>
    %60 = arith.addf %54, %59 : vector<32x128xf32>
    %c124_i32_15 = arith.constant 124 : i32
    %61 = tpu.dynamic_rotate %56 by %c124_i32_15 dim 1 : vector<32x128xf32>, i32 -> vector<32x128xf32>
    %62 = arith.addf %56, %61 : vector<32x128xf32>
    %c124_i32_16 = arith.constant 124 : i32
    %63 = tpu.dynamic_rotate %58 by %c124_i32_16 dim 1 : vector<32x128xf32>, i32 -> vector<32x128xf32>
    %64 = arith.addf %58, %63 : vector<32x128xf32>
    %c124_i32_17 = arith.constant 124 : i32
    %65 = tpu.dynamic_rotate %60 by %c124_i32_17 dim 1 : vector<32x128xf32>, i32 -> vector<32x128xf32>
    %66 = arith.addf %60, %65 : vector<32x128xf32>
    %67 = arith.subf %44, %66 : vector<32x128xf32>
    %68 = math.log %62 : vector<32x128xf32>
    %69 = arith.addf %67, %68 : vector<32x128xf32>
    %70 = arith.divf %64, %62 : vector<32x128xf32>
    %cst_18 = arith.constant 9.99999993E-9 : f32
    %cst_19 = arith.constant 1.000000e+00 : f32
    %71 = vector.broadcast %cst_18 : f32 to vector<32x128xf32>
    %72 = arith.maximumf %71, %70 : vector<32x128xf32>
    %73 = vector.broadcast %cst_19 : f32 to vector<32x128xf32>
    %74 = arith.minimumf %73, %72 : vector<32x128xf32>
    %cst_20 = arith.constant 1.000000e+00 : f32
    %75 = vector.broadcast %cst_20 : f32 to vector<32x128xf32>
    %76 = arith.subf %75, %74 : vector<32x128xf32>
    %77 = arith.mulf %76, %76 : vector<32x128xf32>
    %cst_21 = arith.constant 2.500000e-01 : f32
    %78 = vector.broadcast %cst_21 : f32 to vector<32x128xf32>
    %79 = arith.mulf %78, %77 : vector<32x128xf32>
    %80 = arith.mulf %79, %69 : vector<32x128xf32>
    %c32_i32 = arith.constant 32 : i32
    %81 = arith.muli %arg0, %c32_i32 : i32
    %82 = vector.broadcast %81 : i32 to vector<32x1xi32>
    %83 = arith.addi %82, %6 : vector<32x1xi32>
    %c16_i32 = arith.constant 16 : i32
    %84 = vector.broadcast %c16_i32 : i32 to vector<32x1xi32>
    %85 = arith.muli %83, %84 : vector<32x1xi32>
    %c3_i32 = arith.constant 3 : i32
    %86 = vector.broadcast %c3_i32 : i32 to vector<1x128xi32>
    %87 = arith.shrsi %5, %86 : vector<1x128xi32>
    %88 = vector.broadcast %85 : vector<32x1xi32> to vector<32x128xi32>
    %89 = vector.broadcast %87 : vector<1x128xi32> to vector<32x128xi32>
    %90 = arith.addi %88, %89 : vector<32x128xi32>
    %c0_i32_22 = arith.constant 0 : i32
    %91 = vector.broadcast %c0_i32_22 : i32 to vector<1x128xi32>
    %92 = arith.cmpi eq, %8, %91 : vector<1x128xi32>
    %c64_i32 = arith.constant 64 : i32
    %93 = vector.broadcast %c64_i32 : i32 to vector<32x128xi32>
    %94 = arith.cmpi slt, %90, %93 : vector<32x128xi32>
    %95 = vector.broadcast %92 : vector<1x128xi1> to vector<32x128xi1>
    %96 = arith.andi %95, %94 : vector<32x128xi1>
    %97 = tpu.weird %80 : vector<32x128xf32> -> vector<32x128xi1>
    %cst_23 = arith.constant dense<true> : vector<32x128xi1>
    %98 = arith.xori %97, %cst_23 : vector<32x128xi1>
    %99 = arith.andi %96, %98 : vector<32x128xi1>
    %cst_24 = arith.constant 0.000000e+00 : f32
    %100 = vector.broadcast %cst_24 : f32 to vector<32x128xf32>
    %101 = arith.select %99, %80, %100 : vector<32x128xi1>, vector<32x128xf32>
    %cst_25 = arith.constant dense<0.000000e+00> : vector<128xf32>
    %102 = vector.multi_reduction <add>, %101, %cst_25 [0] : vector<32x128xf32> to vector<128xf32>
    %103 = vector.shape_cast %102 : vector<128xf32> to vector<1x128xf32>
    %104 = vector.shape_cast %103 : vector<1x128xf32> to vector<1x1x128xf32>
    %c0_26 = arith.constant 0 : index
    %c0_27 = arith.constant 0 : index
    %c0_28 = arith.constant 0 : index
    %105 = vector.load %arg3[%c0_26, %c0_27, %c0_28] : memref<1x1x128xf32, #tpu.memory_space<vmem>>, vector<1x1x128xf32>
    tpu.vector_store %arg3[%c0_26, %c0_27, %c0_28], %104 {strides = array<i32>} : memref<1x1x128xf32, #tpu.memory_space<vmem>>, vector<1x1x128xf32>,
    return
  }
  func.func @transform_0(%arg0: i32) -> (i32, i32) {
    %c0_i32 = arith.constant 0 : i32
    %c0_i32_0 = arith.constant 0 : i32
    return %arg0, %c0_i32 : i32, i32
  }
  func.func @transform_1(%arg0: i32) -> (i32, i32) {
    %c0_i32 = arith.constant 0 : i32
    %c0_i32_0 = arith.constant 0 : i32
    return %arg0, %c0_i32 : i32, i32
  }
  func.func @transform_2(%arg0: i32) -> (i32, i32, i32) {
    %c0_i32 = arith.constant 0 : i32
    %c0_i32_0 = arith.constant 0 : i32
    %c0_i32_1 = arith.constant 0 : i32
    return %arg0, %c0_i32, %c0_i32_0 : i32, i32, i32
  }
}

</mosaic_0001>

<llo_original>
// kernel: tpu_custom_call.1
$region0: #{tpu_custom_call.1}
  #allocation0 [shape = 'u32[]', space=smem, size = 0x4, offset = 0x4, fixed_abs, tag = 'smem constant byte address 0x4 - core index']
  #allocation1 [shape = 'u32[144,128]{1,0:T(1,128)}', space=vmem, size = 0x12000, scoped, tag = 'internal scratch']
  %s0 = inlined_call_operand.hbm [shape: f32[4,128], index: 0, kind: input, shape index: {}]
  %s1 = inlined_call_operand.vmem [shape: s8[4,128], index: 1, kind: input, shape index: {}]
  %s2 = inlined_call_operand.hbm [shape: f32[1,1,128], index: 2, kind: output, shape index: {}]
  %s3 = sld [smem:[#allocation0]]
  $region22: #{tpu_custom_call.1} parent=0
    _
  %s5 = ssub.s32 1, %s3
  %s6 = scalar_select 0, %s5, %s3
  $region1: #{tpu_custom_call.1} parent=0
    #allocation2 [shape = 'u8[16384]{0}', space=vmem, size = 0x4000, scoped, tag = 'input window, operand 0, single buffered']
    #allocation3 [shape = 's32[1]{0}', space=sflag, size = 0x4, scoped, tag = 'scoped memory for tpu_custom_call.1']
    #allocation4 [shape = 's32[1]{0}', space=sflag, size = 0x4, scoped, tag = 'scoped memory for tpu_custom_call.1']
    #allocation5 [shape = 'u8[512]{0}', space=vmem, size = 0x400, scoped, tag = 'output window, operand 0, single buffered']
    %7 = vsyncpa [#allocation3], 0
    %8 = vsyncpa [#allocation4], 0
    // Predicated region
    $region2: #{tpu_custom_call.1} parent=1 // pred_check
      _
    $region3: #{tpu_custom_call.1} parent=1 // pred_check_branch
      %10 = sbr.rel (0) target = $region5
    $region4: #{tpu_custom_call.1} parent=1 // pred_region
      %s12 = ssub.s32 512, 64
      %13 = vsyncadd [#allocation3], %s12
      %s14 = sshll.u32 [#allocation2], 4
      %s15 = int_to_ptr.vmem [resolvable:$true] %s14
      %20 = dma.hbm_to_vmem [thread:$0]  %s0, 64, %s15, [#allocation3], 64, 64, 4
    $region5: #{tpu_custom_call.1} parent=1 // pred_fallthru
      _
    // Predicated region
    $region6: #{tpu_custom_call.1} parent=1 // pred_check
      _
    $region7: #{tpu_custom_call.1} parent=1 // pred_check_branch
      %22 = sbr.rel (0) target = $region9
    $region8: #{tpu_custom_call.1} parent=1 // pred_region
      _
    $region9: #{tpu_custom_call.1} parent=1 // pred_fallthru
      _
    // Predicated region
    $region10: #{tpu_custom_call.1} parent=1 // pred_check
      _
    $region11: #{tpu_custom_call.1} parent=1 // pred_check_branch
      %24 = sbr.rel (0) target = $region13
    $region12: #{tpu_custom_call.1} parent=1 // pred_region
      %25 = dma.done [#allocation3], 512
    $region13: #{tpu_custom_call.1} parent=1 // pred_fallthru
      _
    %v26 = vld [vmem:[#allocation2] sm:$0xff]
    %v27 = vld [vmem:[#allocation2 + $0x8] sm:$0xff]
    %v28 = vld [vmem:[#allocation2 + $0x10] sm:$0xff]
    %v29 = vld [vmem:[#allocation2 + $0x18] sm:$0xff]
    %v30 = vmax.f32 %v26, -100.0
    %v31 = vmax.f32 %v27, -100.0
    %v32 = vmax.f32 %v28, -100.0
    %v33 = vmax.f32 %v29, -100.0
    %v34 = vmin.f32 %v30, 100.0
    %v35 = vmin.f32 %v31, 100.0
    %v36 = vmin.f32 %v32, 100.0
    %v37 = vmin.f32 %v33, 100.0
    %v38 = vlaneseq
    %v39 = vand.u32 %v38, 127
    %v40 = vlaneseq
    %v41 = vshrl.u32 %v40, 7
    %v42 = vadd.s32 %v41, 8
    %v43 = vadd.s32 %v41, 16
    %v44 = vadd.s32 %v41, 24
    %v45 = vand.u32 %v39, 7
    %v46 = vld [vmem:[%s1] sm:$0x1]
    %v47 = vld [vmem:[%s1 + $0x1] sm:$0x1]
    %v48 = vld [vmem:[%s1 + $0x2] sm:$0x1]
    %v49 = vld [vmem:[%s1 + $0x3] sm:$0x1]
    %v50 = vld [vmem:[%s1 + $0x4] sm:$0x1]
    %v51 = vld [vmem:[%s1 + $0x5] sm:$0x1]
    %v52 = vld [vmem:[%s1 + $0x6] sm:$0x1]
    %v53 = vld [vmem:[%s1 + $0x7] sm:$0x1]
    %v54 = vunpack.c.0.s8 %v46
    %v55 = vunpack.c.0.s8 %v47
    %v56 = vunpack.c.0.s8 %v48
    %v57 = vunpack.c.0.s8 %v49
    %v58 = vunpack.c.0.s8 %v50
    %v59 = vunpack.c.0.s8 %v51
    %v60 = vunpack.c.0.s8 %v52
    %v61 = vunpack.c.0.s8 %v53
    %v62 = vcombine.low %v54, %v55
    %v63 = vcombine.low %v56, %v57
    %v64 = vcombine.low %v58, %v59
    %v65 = vcombine.low %v60, %v61
    %vm66 = vcmp.eq.s32.totalorder %v45, %v62
    %vm67 = vcmp.eq.s32.totalorder %v45, %v63
    %vm68 = vcmp.eq.s32.totalorder %v45, %v64
    %vm69 = vcmp.eq.s32.totalorder %v45, %v65
    %v70 = vsel %vm66, 1, 0
    %v71 = vsel %vm67, 1, 0
    %v72 = vsel %vm68, 1, 0
    %v73 = vsel %vm69, 1, 0
    %v74 = vcvt.s32.f32 %v70
    %v75 = vcvt.s32.f32 %v71
    %v76 = vcvt.s32.f32 %v72
    %v77 = vcvt.s32.f32 %v73
    %78 = vrot.lane.b32.xlu0 %v34, 127
    %v79 = vpop.permute.xlu0 %78
    %80 = vrot.lane.b32.xlu0 %v35, 127
    %v81 = vpop.permute.xlu0 %80
    %82 = vrot.lane.b32.xlu0 %v36, 127
    %v83 = vpop.permute.xlu0 %82
    %84 = vrot.lane.b32.xlu0 %v37, 127
    %v85 = vpop.permute.xlu0 %84
    %86 = vrot.lane.b32.xlu0 %v34, 1
    %v87 = vpop.permute.xlu0 %86
    %88 = vrot.lane.b32.xlu0 %v35, 1
    %v89 = vpop.permute.xlu0 %88
    %90 = vrot.lane.b32.xlu0 %v36, 1
    %v91 = vpop.permute.xlu0 %90
    %92 = vrot.lane.b32.xlu0 %v37, 1
    %v93 = vpop.permute.xlu0 %92
    %v94 = vand.u32 %v39, 1
    %vm95 = vcmp.eq.s32.totalorder %v94, 0
    %v96 = vsel %vm95, 1, 0
    %vm97 = vcmp.eq.s32.totalorder %v96, 1
    %v98 = vsel %vm97, %v79, %v87
    %v99 = vsel %vm97, %v81, %v89
    %v100 = vsel %vm97, %v83, %v91
    %v101 = vsel %vm97, %v85, %v93
    %v102 = vmax.f32 %v34, %v98
    %v103 = vmax.f32 %v35, %v99
    %v104 = vmax.f32 %v36, %v100
    %v105 = vmax.f32 %v37, %v101
    %106 = vrot.lane.b32.xlu0 %v102, 126
    %v107 = vpop.permute.xlu0 %106
    %108 = vrot.lane.b32.xlu0 %v103, 126
    %v109 = vpop.permute.xlu0 %108
    %110 = vrot.lane.b32.xlu0 %v104, 126
    %v111 = vpop.permute.xlu0 %110
    %112 = vrot.lane.b32.xlu0 %v105, 126
    %v113 = vpop.permute.xlu0 %112
    %114 = vrot.lane.b32.xlu0 %v102, 2
    %v115 = vpop.permute.xlu0 %114
    %116 = vrot.lane.b32.xlu0 %v103, 2
    %v117 = vpop.permute.xlu0 %116
    %118 = vrot.lane.b32.xlu0 %v104, 2
    %v119 = vpop.permute.xlu0 %118
    %120 = vrot.lane.b32.xlu0 %v105, 2
    %v121 = vpop.permute.xlu0 %120
    %v122 = vand.u32 %v39, 2
    %vm123 = vcmp.eq.s32.totalorder %v122, 0
    %v124 = vsel %vm123, 1, 0
    %vm125 = vcmp.eq.s32.totalorder %v124, 1
    %v126 = vsel %vm125, %v107, %v115
    %v127 = vsel %vm125, %v109, %v117
    %v128 = vsel %vm125, %v111, %v119
    %v129 = vsel %vm125, %v113, %v121
    %v130 = vmax.f32 %v102, %v126
    %v131 = vmax.f32 %v103, %v127
    %v132 = vmax.f32 %v104, %v128
    %v133 = vmax.f32 %v105, %v129
    %134 = vrot.lane.b32.xlu0 %v130, 124
    %v135 = vpop.permute.xlu0 %134
    %136 = vrot.lane.b32.xlu0 %v131, 124
    %v137 = vpop.permute.xlu0 %136
    %138 = vrot.lane.b32.xlu0 %v132, 124
    %v139 = vpop.permute.xlu0 %138
    %140 = vrot.lane.b32.xlu0 %v133, 124
    %v141 = vpop.permute.xlu0 %140
    %142 = vrot.lane.b32.xlu0 %v130, 4
    %v143 = vpop.permute.xlu0 %142
    %144 = vrot.lane.b32.xlu0 %v131, 4
    %v145 = vpop.permute.xlu0 %144
    %146 = vrot.lane.b32.xlu0 %v132, 4
    %v147 = vpop.permute.xlu0 %146
    %148 = vrot.lane.b32.xlu0 %v133, 4
    %v149 = vpop.permute.xlu0 %148
    %v150 = vand.u32 %v39, 4
    %vm151 = vcmp.eq.s32.totalorder %v150, 0
    %v152 = vsel %vm151, 1, 0
    %vm153 = vcmp.eq.s32.totalorder %v152, 1
    %v154 = vsel %vm153, %v135, %v143
    %v155 = vsel %vm153, %v137, %v145
    %v156 = vsel %vm153, %v139, %v147
    %v157 = vsel %vm153, %v141, %v149
    %v158 = vmax.f32 %v130, %v154
    %v159 = vmax.f32 %v131, %v155
    %v160 = vmax.f32 %v132, %v156
    %v161 = vmax.f32 %v133, %v157
    %v162 = vsub.f32 %v34, %v158
    %v163 = vsub.f32 %v35, %v159
    %v164 = vsub.f32 %v36, %v160
    %v165 = vsub.f32 %v37, %v161
    %v166 = vmul.f32 %v162, 1.442695
    %v167 = vpow.pop %v166
    %v168 = vmul.f32 %v163, 1.442695
    %v169 = vpow.pop %v168
    %v170 = vmul.f32 %v164, 1.442695
    %v171 = vpow.pop %v170
    %v172 = vmul.f32 %v165, 1.442695
    %v173 = vpow.pop %v172
    %v174 = vmul.f32 %v167, %v74
    %v175 = vmul.f32 %v169, %v75
    %v176 = vmul.f32 %v171, %v76
    %v177 = vmul.f32 %v173, %v77
    %v178 = vmul.f32 %v34, %v74
    %v179 = vmul.f32 %v35, %v75
    %v180 = vmul.f32 %v36, %v76
    %v181 = vmul.f32 %v37, %v77
    %182 = vrot.lane.b32.xlu0 %v167, 127
    %v183 = vpop.permute.xlu0 %182
    %184 = vrot.lane.b32.xlu0 %v169, 127
    %v185 = vpop.permute.xlu0 %184
    %186 = vrot.lane.b32.xlu0 %v171, 127
    %v187 = vpop.permute.xlu0 %186
    %188 = vrot.lane.b32.xlu0 %v173, 127
    %v189 = vpop.permute.xlu0 %188
    %v190 = vadd.f32 %v167, %v183
    %v191 = vadd.f32 %v169, %v185
    %v192 = vadd.f32 %v171, %v187
    %v193 = vadd.f32 %v173, %v189
    %194 = vrot.lane.b32.xlu0 %v174, 127
    %v195 = vpop.permute.xlu0 %194
    %196 = vrot.lane.b32.xlu0 %v175, 127
    %v197 = vpop.permute.xlu0 %196
    %198 = vrot.lane.b32.xlu0 %v176, 127
    %v199 = vpop.permute.xlu0 %198
    %200 = vrot.lane.b32.xlu0 %v177, 127
    %v201 = vpop.permute.xlu0 %200
    %v202 = vadd.f32 %v174, %v195
    %v203 = vadd.f32 %v175, %v197
    %v204 = vadd.f32 %v176, %v199
    %v205 = vadd.f32 %v177, %v201
    %206 = vrot.lane.b32.xlu0 %v178, 127
    %v207 = vpop.permute.xlu0 %206
    %208 = vrot.lane.b32.xlu0 %v179, 127
    %v209 = vpop.permute.xlu0 %208
    %210 = vrot.lane.b32.xlu0 %v180, 127
    %v211 = vpop.permute.xlu0 %210
    %212 = vrot.lane.b32.xlu0 %v181, 127
    %v213 = vpop.permute.xlu0 %212
    %v214 = vadd.f32 %v178, %v207
    %v215 = vadd.f32 %v179, %v209
    %v216 = vadd.f32 %v180, %v211
    %v217 = vadd.f32 %v181, %v213
    %218 = vrot.lane.b32.xlu0 %v190, 126
    %v219 = vpop.permute.xlu0 %218
    %220 = vrot.lane.b32.xlu0 %v191, 126
    %v221 = vpop.permute.xlu0 %220
    %222 = vrot.lane.b32.xlu0 %v192, 126
    %v223 = vpop.permute.xlu0 %222
    %224 = vrot.lane.b32.xlu0 %v193, 126
    %v225 = vpop.permute.xlu0 %224
    %v226 = vadd.f32 %v190, %v219
    %v227 = vadd.f32 %v191, %v221
    %v228 = vadd.f32 %v192, %v223
    %v229 = vadd.f32 %v193, %v225
    %230 = vrot.lane.b32.xlu0 %v202, 126
    %v231 = vpop.permute.xlu0 %230
    %232 = vrot.lane.b32.xlu0 %v203, 126
    %v233 = vpop.permute.xlu0 %232
    %234 = vrot.lane.b32.xlu0 %v204, 126
    %v235 = vpop.permute.xlu0 %234
    %236 = vrot.lane.b32.xlu0 %v205, 126
    %v237 = vpop.permute.xlu0 %236
    %v238 = vadd.f32 %v202, %v231
    %v239 = vadd.f32 %v203, %v233
    %v240 = vadd.f32 %v204, %v235
    %v241 = vadd.f32 %v205, %v237
    %242 = vrot.lane.b32.xlu0 %v214, 126
    %v243 = vpop.permute.xlu0 %242
    %244 = vrot.lane.b32.xlu0 %v215, 126
    %v245 = vpop.permute.xlu0 %244
    %246 = vrot.lane.b32.xlu0 %v216, 126
    %v247 = vpop.permute.xlu0 %246
    %248 = vrot.lane.b32.xlu0 %v217, 126
    %v249 = vpop.permute.xlu0 %248
    %v250 = vadd.f32 %v214, %v243
    %v251 = vadd.f32 %v215, %v245
    %v252 = vadd.f32 %v216, %v247
    %v253 = vadd.f32 %v217, %v249
    %254 = vrot.lane.b32.xlu0 %v226, 124
    %v255 = vpop.permute.xlu0 %254
    %256 = vrot.lane.b32.xlu0 %v227, 124
    %v257 = vpop.permute.xlu0 %256
    %258 = vrot.lane.b32.xlu0 %v228, 124
    %v259 = vpop.permute.xlu0 %258
    %260 = vrot.lane.b32.xlu0 %v229, 124
    %v261 = vpop.permute.xlu0 %260
    %v262 = vadd.f32 %v226, %v255
    %v263 = vadd.f32 %v227, %v257
    %v264 = vadd.f32 %v228, %v259
    %v265 = vadd.f32 %v229, %v261
    %266 = vrot.lane.b32.xlu0 %v238, 124
    %v267 = vpop.permute.xlu0 %266
    %268 = vrot.lane.b32.xlu0 %v239, 124
    %v269 = vpop.permute.xlu0 %268
    %270 = vrot.lane.b32.xlu0 %v240, 124
    %v271 = vpop.permute.xlu0 %270
    %272 = vrot.lane.b32.xlu0 %v241, 124
    %v273 = vpop.permute.xlu0 %272
    %v274 = vadd.f32 %v238, %v267
    %v275 = vadd.f32 %v239, %v269
    %v276 = vadd.f32 %v240, %v271
    %v277 = vadd.f32 %v241, %v273
    %278 = vrot.lane.b32.xlu0 %v250, 124
    %v279 = vpop.permute.xlu0 %278
    %280 = vrot.lane.b32.xlu0 %v251, 124
    %v281 = vpop.permute.xlu0 %280
    %282 = vrot.lane.b32.xlu0 %v252, 124
    %v283 = vpop.permute.xlu0 %282
    %284 = vrot.lane.b32.xlu0 %v253, 124
    %v285 = vpop.permute.xlu0 %284
    %v286 = vadd.f32 %v250, %v279
    %v287 = vadd.f32 %v251, %v281
    %v288 = vadd.f32 %v252, %v283
    %v289 = vadd.f32 %v253, %v285
    %v290 = vsub.f32 %v158, %v286
    %v291 = vsub.f32 %v159, %v287
    %v292 = vsub.f32 %v160, %v288
    %v293 = vsub.f32 %v161, %v289
    %v294 = vlog2.pop %v262
    %v295 = vmul.f32 %v294, 0.6931472
    %v296 = vlog2.pop %v263
    %v297 = vmul.f32 %v296, 0.6931472
    %v298 = vlog2.pop %v264
    %v299 = vmul.f32 %v298, 0.6931472
    %v300 = vlog2.pop %v265
    %v301 = vmul.f32 %v300, 0.6931472
    %v302 = vadd.f32 %v290, %v295
    %v303 = vadd.f32 %v291, %v297
    %v304 = vadd.f32 %v292, %v299
    %v305 = vadd.f32 %v293, %v301
    %v306 = vrcp.pop %v262
    %v307 = vmul.f32 %v274, %v306
    %v308 = vrcp.pop %v263
    %v309 = vmul.f32 %v275, %v308
    %v310 = vrcp.pop %v264
    %v311 = vmul.f32 %v276, %v310
    %v312 = vrcp.pop %v265
    %v313 = vmul.f32 %v277, %v312
    %v314 = vmax.f32 %v307, 1e-08
    %v315 = vmax.f32 %v309, 1e-08
    %v316 = vmax.f32 %v311, 1e-08
    %v317 = vmax.f32 %v313, 1e-08
    %v318 = vmin.f32 %v314, 1.0
    %v319 = vmin.f32 %v315, 1.0
    %v320 = vmin.f32 %v316, 1.0
    %v321 = vmin.f32 %v317, 1.0
    %v322 = vsub.f32 1.0, %v318
    %v323 = vsub.f32 1.0, %v319
    %v324 = vsub.f32 1.0, %v320
    %v325 = vsub.f32 1.0, %v321
    %v326 = vmul.f32 %v322, %v322
    %v327 = vmul.f32 %v323, %v323
    %v328 = vmul.f32 %v324, %v324
    %v329 = vmul.f32 %v325, %v325
    %v330 = vmul.f32 %v326, 0.25
    %v331 = vmul.f32 %v327, 0.25
    %v332 = vmul.f32 %v328, 0.25
    %v333 = vmul.f32 %v329, 0.25
    %v334 = vmul.f32 %v330, %v302
    %v335 = vmul.f32 %v331, %v303
    %v336 = vmul.f32 %v332, %v304
    %v337 = vmul.f32 %v333, %v305
    %s338 = smul.u32 0, 32
    %v339 = vstv %s338
    %v340 = vadd.s32 %v339, %v41
    %v341 = vadd.s32 %v339, %v42
    %v342 = vadd.s32 %v339, %v43
    %v343 = vadd.s32 %v339, %v44
    %v344 = vmul.u32 %v340, 16
    %v345 = vmul.u32 %v341, 16
    %v346 = vmul.u32 %v342, 16
    %v347 = vmul.u32 %v343, 16
    %v348 = vshra.s32 %v39, 3
    %v349 = vadd.s32 %v344, %v348
    %v350 = vadd.s32 %v345, %v348
    %v351 = vadd.s32 %v346, %v348
    %v352 = vadd.s32 %v347, %v348
    %vm353 = vcmp.eq.s32.totalorder %v45, 0
    %vm354 = vcmp.lt.s32.totalorder %v349, 64
    %vm355 = vcmp.lt.s32.totalorder %v350, 64
    %vm356 = vcmp.lt.s32.totalorder %v351, 64
    %vm357 = vcmp.lt.s32.totalorder %v352, 64
    %v358 = vsel %vm353, 1, 0
    %vm359 = vcmp.eq.s32.totalorder %v358, 1
    %vm360 = vmand %vm359, %vm354
    %vm361 = vmand %vm359, %vm355
    %vm362 = vmand %vm359, %vm356
    %vm363 = vmand %vm359, %vm357
    %vm364 = vweird.f32 %v334
    %vm365 = vweird.f32 %v335
    %vm366 = vweird.f32 %v336
    %vm367 = vweird.f32 %v337
    %vm368 = vmxor %vm364, 1
    %vm369 = vmxor %vm365, 1
    %vm370 = vmxor %vm366, 1
    %vm371 = vmxor %vm367, 1
    %vm372 = vmand %vm360, %vm368
    %vm373 = vmand %vm361, %vm369
    %vm374 = vmand %vm362, %vm370
    %vm375 = vmand %vm363, %vm371
    %v376 = vsel %vm372, %v334, 0.0
    %v377 = vsel %vm373, %v335, 0.0
    %v378 = vsel %vm374, %v336, 0.0
    %v379 = vsel %vm375, %v337, 0.0
    %v380 = vadd.f32 %v376, %v377
    %v381 = vadd.f32 %v380, %v378
    %v382 = vadd.f32 %v381, %v379
    %v383 = vrot.slane %v382, 4
    %v384 = vadd.f32 %v382, %v383
    %v385 = vrot.slane %v384, 2
    %v386 = vadd.f32 %v384, %v385
    %v387 = vrot.slane %v386, 1
    %v388 = vadd.f32 %v386, %v387
    %389 = vst [vmem:[#allocation5] sm:$0x1] %v388
    // Predicated region
    $region14: #{tpu_custom_call.1} parent=1 // pred_check
      _
    $region15: #{tpu_custom_call.1} parent=1 // pred_check_branch
      %391 = sbr.rel (0) target = $region17
    $region16: #{tpu_custom_call.1} parent=1 // pred_region
      %s393 = ssub.s32 16, 16
      %394 = vsyncadd [#allocation4], %s393
      %s396 = sshll.u32 [#allocation5], 4
      %s397 = int_to_ptr.vmem [resolvable:$true] %s396
      %399 = dma.vmem_to_hbm [thread:$0]  %s397, 16, %s2, [#allocation4]
    $region17: #{tpu_custom_call.1} parent=1 // pred_fallthru
      _
    // Predicated region
    $region18: #{tpu_custom_call.1} parent=1 // pred_check
      _
    $region19: #{tpu_custom_call.1} parent=1 // pred_check_branch
      %401 = sbr.rel (0) target = $region21
    $region20: #{tpu_custom_call.1} parent=1 // pred_region
      %402 = dma.done [#allocation4], 16
    $region21: #{tpu_custom_call.1} parent=1 // pred_fallthru
      _
    %403 = vsyncpa [#allocation3], 1
    %404 = vsyncpa [#allocation4], 1

</llo_original>
